<compile_context>
chip_gen: v7x
topology: tpu7x:2x2x1
jax: 0.10.0
libtpu: 0.0.40
codegen_flags: <defaults>
</compile_context>

<pallas_src>
import functools

import jax
import jax.numpy as jnp
from jax import lax
from jax.experimental import pallas as pl
from jax.experimental.pallas import tpu as pltpu


def _modln_kernel(x_ref, aff_ref, o_ref, *, eps, inv_d, d_true, d_pad):
    # x_ref:   (TB, TN, Dp) tile of x.
    # aff_ref: (TB, 2, Dp) per-batch fused affine; [:,0,:]=scale, [:,1,:]=shift.
    x = x_ref[...].astype(jnp.float32)                           # (TB, TN, Dp)
    cscale = aff_ref[:, 0, :].astype(jnp.float32)                # (TB, Dp)
    cshift = aff_ref[:, 1, :].astype(jnp.float32)                # (TB, Dp)

    # LayerNorm over the TRUE last dim (padded lanes are zero in x), biased
    # variance like torch.nn.LayerNorm, stable centered two-pass form.
    # sum * (1/D) instead of jnp.mean: avoids a lowered divide per row.
    mean = jnp.sum(x, axis=-1, keepdims=True) * inv_d            # (TB, TN, 1)
    xc = x - mean
    if d_pad != d_true:
        # zero the padded lanes so they do not contribute to the variance
        lane = lax.broadcasted_iota(jnp.int32, (1, 1, d_pad), 2)
        xc = jnp.where(lane < d_true, xc, 0.0)
    var = jnp.sum(xc * xc, axis=-1, keepdims=True) * inv_d       # (TB, TN, 1)
    xhat = xc * lax.rsqrt(var + eps)                             # (TB, TN, Dp)

    # Fused affine: gamma*(1+scale) and beta*(1+scale)+shift precomputed.
    out = xhat * cscale[:, None, :] + cshift[:, None, :]
    o_ref[...] = out.astype(o_ref.dtype)


def _choose_tiles(B, N, row_bytes, sub, target_bytes):
    """Pick (TB, TN) so one x tile is ~target_bytes and sublane-aligned."""
    rows_target = max(sub, target_bytes // max(1, row_bytes))
    if N > rows_target:
        # Large N: tile the sequence axis, one batch element per block.
        tn = min(N, max(sub, (rows_target // sub) * sub))
        tb = 1
    else:
        # Small N: take the whole sequence and block over batch instead
        # (avoids many tiny grid steps dominated by per-step overhead).
        tn = N
        tb = max(1, min(B, rows_target // max(1, N)))
    # Keep >= 2 grid steps when cheaply possible (v7x has 2 TensorCores).
    if tb >= B and tn >= N:
        if B > 1:
            tb = max(1, B // 2)
        elif N >= 2 * sub:
            tn = max(sub, ((N // 2 + sub - 1) // sub) * sub)
    return tb, tn


def modln_forward(x, mod, w, b, gamma, beta, *, eps,
                  target_tile_bytes=2 << 20):
    """x: [B, N, D], mod: [B, M], w: [M, 2D], b: [2D], gamma/beta: [D]."""
    B, N, D = x.shape
    itemsize = jnp.dtype(x.dtype).itemsize
    sub = {4: 8, 2: 16, 1: 32}.get(itemsize, 8)   # sublane packing per dtype

    # ---- adaLN MLP hoisted out of the hot path (tiny (B,M)@(M,2D) matmul) ----
    mod_f32 = mod.astype(jnp.float32)
    silu = mod_f32 * jax.nn.sigmoid(mod_f32)                       # SiLU
    ss = silu @ w.astype(jnp.float32) + b.astype(jnp.float32)      # (B, 2D)
    shift, scale = ss[:, :D], ss[:, D:]                            # torch.chunk order
    one_plus_scale = 1.0 + scale
    cscale = gamma.astype(jnp.float32)[None, :] * one_plus_scale           # (B, D)
    cshift = beta.astype(jnp.float32)[None, :] * one_plus_scale + shift    # (B, D)

    # ---- pad D to a multiple of 128 for lane-dense, unmasked stores ----
    D_pad = ((D + 127) // 128) * 128
    if D_pad != D:
        x_in = jnp.pad(x, ((0, 0), (0, 0), (0, D_pad - D)))
        cscale = jnp.pad(cscale, ((0, 0), (0, D_pad - D)))
        cshift = jnp.pad(cshift, ((0, 0), (0, D_pad - D)))
    else:
        x_in = x
    # Pack both per-batch affine vectors into one (B, 2, Dp) resident block.
    affine = jnp.stack([cscale, cshift], axis=1)                   # (B, 2, Dp)

    # ---- tile selection (bytes-targeted, dtype-aligned) ----
    row_bytes = D_pad * itemsize
    TB, TN = _choose_tiles(B, N, row_bytes, sub, target_tile_bytes)
    grid = (pl.cdiv(B, TB), pl.cdiv(N, TN))

    # ---- explicit VMEM budget: 2x in + 2x out dbl-buffers + ~3 f32 temps ----
    tile_elems = TB * TN * D_pad
    vmem_budget = (4 * tile_elems * itemsize          # in/out double buffers
                   + 3 * tile_elems * 4               # f32 temporaries
                   + 4 * TB * 2 * D_pad * 4           # affine block (+buffering)
                   + (2 << 20))                       # slack
    vmem_limit = int(min(48 * 1024 * 1024, max(vmem_budget, 16 * 1024 * 1024)))

    kernel = functools.partial(_modln_kernel, eps=float(eps),
                               inv_d=1.0 / float(D), d_true=D, d_pad=D_pad)

    cost = pl.CostEstimate(
        flops=8 * B * N * D,
        transcendentals=B * N,                                     # rsqrt per row
        bytes_accessed=2 * B * N * D * itemsize + 2 * B * D * 4,
    )

    out = pl.pallas_call(
        kernel,
        out_shape=jax.ShapeDtypeStruct((B, N, D_pad), x.dtype),
        grid_spec=pltpu.PrefetchScalarGridSpec(
            num_scalar_prefetch=0,
            grid=grid,
            in_specs=[
                # x tile: (TB, TN, Dp)
                pl.BlockSpec((TB, TN, D_pad), lambda bi, si: (bi, si, 0)),
                # fused per-batch affine: (TB, 2, Dp), resident across seq tiles
                pl.BlockSpec((TB, 2, D_pad), lambda bi, si: (bi, 0, 0)),
            ],
            out_specs=pl.BlockSpec((TB, TN, D_pad), lambda bi, si: (bi, si, 0)),
        ),
        compiler_params=pltpu.CompilerParams(
            dimension_semantics=("parallel", "parallel"),
            vmem_limit_bytes=vmem_limit),
        cost_estimate=cost,
    )(x_in, affine)

    if D_pad != D:
        out = out[..., :D]
    return out


def modln_reference(x, mod, w, b, gamma, beta, *, eps):
    silu = mod * jax.nn.sigmoid(mod)
    ss = silu @ w + b
    D = x.shape[-1]
    shift, scale = ss[:, :D], ss[:, D:]
    mean = jnp.mean(x, axis=-1, keepdims=True)
    var = jnp.mean((x - mean) ** 2, axis=-1, keepdims=True)
    xn = (x - mean) * lax.rsqrt(var + eps) * gamma + beta
    return xn * (1.0 + scale[:, None, :]) + shift[:, None, :]


if __name__ == "__main__":
    eps = 1e-6
    root_key = jax.random.PRNGKey(0)

    def run_case(case_id, B, N, D, M, target_tile_bytes):
        k = jax.random.fold_in(root_key, case_id)
        kx, kmod, kw, kb = jax.random.split(k, 4)
        x = jax.random.normal(kx, (B, N, D), dtype=jnp.float32)
        mod = jax.random.normal(kmod, (B, M), dtype=jnp.float32)
        # Synthetic parameters (shapes from ModLN.__init__):
        #   nn.Linear(mod_dim, inner_dim*2): weight [2D, M] (stored transposed
        #   here as [M, 2D]), bias [2D]; nn.LayerNorm(inner_dim): weight/bias [D].
        w = (jax.random.uniform(kw, (M, 2 * D), dtype=jnp.float32) - 0.5) * 0.2
        b = (jax.random.uniform(kb, (2 * D,), dtype=jnp.float32) - 0.5) * 0.2
        gamma = jnp.ones((D,), dtype=jnp.float32)
        beta = jnp.zeros((D,), dtype=jnp.float32)

        out = modln_forward(x, mod, w, b, gamma, beta, eps=eps,
                            target_tile_bytes=target_tile_bytes)
        out = jax.block_until_ready(out)

        ref = modln_reference(x, mod, w, b, gamma, beta, eps=eps)
        assert out.shape == (B, N, D)
        assert jnp.allclose(out, ref, atol=2e-5, rtol=2e-5)

    # Case 1: lane-dense D, small N -> batch-blocked path, grid split for 2 TCs.
    run_case(1, B=2, N=16, D=128, M=32, target_tile_bytes=2 << 20)
    # Case 2: D not a multiple of 128 (padded + masked stats) with a tiny tile
    # target so the sequence-tiling path and tail tiles are exercised.
    run_case(2, B=2, N=24, D=96, M=32, target_tile_bytes=8 * 1024)

    print("KERNEL_OK")
</pallas_src>

<mosaic_0001>
module attributes {stable_mosaic.version = 11 : i64} {
  func.func @_modln_kernel(%arg0: i32, %arg1: i32, %arg2: memref<1x16x128xf32, #tpu.memory_space<vmem>>, %arg3: memref<1x2x128xf32, #tpu.memory_space<vmem>>, %arg4: memref<1x16x128xf32, #tpu.memory_space<vmem>>) attributes {dimension_semantics = [#tpu.dimension_semantics<parallel>, #tpu.dimension_semantics<parallel>], iteration_bounds = array<i64: 2, 1>, scalar_prefetch = 0 : i64, scratch_operands = 0 : i64, tpu.core_type = #tpu.core_type<tc>, window_params = [{transform_indices = @transform_0, window_bounds = array<i64: 1, 16, 128>}, {transform_indices = @transform_1, window_bounds = array<i64: 1, 2, 128>}, {transform_indices = @transform_2, window_bounds = array<i64: 1, 16, 128>}]} {
    %c0 = arith.constant 0 : index
    %c0_0 = arith.constant 0 : index
    %c0_1 = arith.constant 0 : index
    %0 = vector.load %arg2[%c0, %c0_0, %c0_1] : memref<1x16x128xf32, #tpu.memory_space<vmem>>, vector<1x16x128xf32>
    %c0_2 = arith.constant 0 : index
    %c0_3 = arith.constant 0 : index
    %c0_4 = arith.constant 0 : index
    %1 = vector.load %arg3[%c0_2, %c0_3, %c0_4] : memref<1x2x128xf32, #tpu.memory_space<vmem>>, vector<1x1x128xf32>
    %2 = vector.shape_cast %1 : vector<1x1x128xf32> to vector<1x128xf32>
    %c0_5 = arith.constant 0 : index
    %c1 = arith.constant 1 : index
    %c0_6 = arith.constant 0 : index
    %3 = vector.load %arg3[%c0_5, %c1, %c0_6] : memref<1x2x128xf32, #tpu.memory_space<vmem>>, vector<1x1x128xf32>
    %4 = vector.shape_cast %3 : vector<1x1x128xf32> to vector<1x128xf32>
    %cst = arith.constant dense<0.000000e+00> : vector<1x16xf32>
    %5 = vector.multi_reduction <add>, %0, %cst [2] : vector<1x16x128xf32> to vector<1x16xf32>
    %6 = vector.shape_cast %5 : vector<1x16xf32> to vector<1x16x1xf32>
    %cst_7 = arith.constant 7.812500e-03 : f32
    %7 = vector.broadcast %cst_7 : f32 to vector<1x16x1xf32>
    %8 = arith.mulf %6, %7 : vector<1x16x1xf32>
    %9 = vector.broadcast %8 : vector<1x16x1xf32> to vector<1x16x128xf32>
    %10 = arith.subf %0, %9 : vector<1x16x128xf32>
    %11 = arith.mulf %10, %10 : vector<1x16x128xf32>
    %cst_8 = arith.constant dense<0.000000e+00> : vector<1x16xf32>
    %12 = vector.multi_reduction <add>, %11, %cst_8 [2] : vector<1x16x128xf32> to vector<1x16xf32>
    %13 = vector.shape_cast %12 : vector<1x16xf32> to vector<1x16x1xf32>
    %cst_9 = arith.constant 7.812500e-03 : f32
    %14 = vector.broadcast %cst_9 : f32 to vector<1x16x1xf32>
    %15 = arith.mulf %13, %14 : vector<1x16x1xf32>
    %cst_10 = arith.constant 9.99999997E-7 : f32
    %16 = vector.broadcast %cst_10 : f32 to vector<1x16x1xf32>
    %17 = arith.addf %15, %16 : vector<1x16x1xf32>
    %18 = math.rsqrt %17 : vector<1x16x1xf32>
    %19 = vector.broadcast %18 : vector<1x16x1xf32> to vector<1x16x128xf32>
    %20 = arith.mulf %10, %19 : vector<1x16x128xf32>
    %21 = vector.shape_cast %2 : vector<1x128xf32> to vector<1x1x128xf32>
    %22 = vector.broadcast %21 : vector<1x1x128xf32> to vector<1x16x128xf32>
    %23 = arith.mulf %20, %22 : vector<1x16x128xf32>
    %24 = vector.shape_cast %4 : vector<1x128xf32> to vector<1x1x128xf32>
    %25 = vector.broadcast %24 : vector<1x1x128xf32> to vector<1x16x128xf32>
    %26 = arith.addf %23, %25 : vector<1x16x128xf32>
    %c0_11 = arith.constant 0 : index
    %c0_12 = arith.constant 0 : index
    %c0_13 = arith.constant 0 : index
    %27 = vector.load %arg4[%c0_11, %c0_12, %c0_13] : memref<1x16x128xf32, #tpu.memory_space<vmem>>, vector<1x16x128xf32>
    tpu.vector_store %arg4[%c0_11, %c0_12, %c0_13], %26 {strides = array<i32>} : memref<1x16x128xf32, #tpu.memory_space<vmem>>, vector<1x16x128xf32>,
    return
  }
  func.func @transform_0(%arg0: i32, %arg1: i32) -> (i32, i32, i32) {
    %c0_i32 = arith.constant 0 : i32
    %c0_i32_0 = arith.constant 0 : i32
    return %arg0, %arg1, %c0_i32 : i32, i32, i32
  }
  func.func @transform_1(%arg0: i32, %arg1: i32) -> (i32, i32, i32) {
    %c0_i32 = arith.constant 0 : i32
    %c0_i32_0 = arith.constant 0 : i32
    %c0_i32_1 = arith.constant 0 : i32
    return %arg0, %c0_i32, %c0_i32_0 : i32, i32, i32
  }
  func.func @transform_2(%arg0: i32, %arg1: i32) -> (i32, i32, i32) {
    %c0_i32 = arith.constant 0 : i32
    %c0_i32_0 = arith.constant 0 : i32
    return %arg0, %arg1, %c0_i32 : i32, i32, i32
  }
}

</mosaic_0001>

<llo_original>
// kernel: tpu_custom_call.1
$region0: #{tpu_custom_call.1}
  #allocation0 [shape = 'u32[]', space=smem, size = 0x4, offset = 0x4, fixed_abs, tag = 'smem constant byte address 0x4 - core index']
  #allocation1 [shape = 'u32[144,128]{1,0:T(1,128)}', space=vmem, size = 0x12000, scoped, tag = 'internal scratch']
  %s0 = inlined_call_operand.hbm [shape: f32[2,16,128], index: 0, kind: input, shape index: {}]
  %s1 = inlined_call_operand.hbm [shape: f32[2,2,128], index: 1, kind: input, shape index: {}]
  %s2 = inlined_call_operand.hbm [shape: f32[2,16,128], index: 2, kind: output, shape index: {}]
  %s3 = sld [smem:[#allocation0]]
  $region49: #{tpu_custom_call.1} parent=0
    _
  %s5 = ssub.s32 1, %s3
  %s6 = scalar_select 0, %s5, %s3
  $region1: #{tpu_custom_call.1} parent=0
    #allocation2 [shape = 'u8[16384]{0}', space=vmem, size = 0x4000, scoped, tag = 'input window, operand 0']
    #allocation3 [shape = 's32[2]{0}', space=sflag, size = 0x8, scoped, tag = 'scoped memory for tpu_custom_call.1']
    #allocation4 [shape = 's32[2]{0}', space=sflag, size = 0x8, scoped, tag = 'scoped memory for tpu_custom_call.1']
    #allocation5 [shape = 'u8[2048]{0}', space=vmem, size = 0x800, scoped, tag = 'input window, operand 1']
    #allocation6 [shape = 's32[2]{0}', space=sflag, size = 0x8, scoped, tag = 'scoped memory for tpu_custom_call.1']
    #allocation7 [shape = 'u8[16384]{0}', space=vmem, size = 0x4000, scoped, tag = 'output window, operand 0']
    %7 = vsyncpa [#allocation3], 0
    %s8 = scalar_lea.sflag [#allocation3], 1
    %9 = vsyncpa %s8, 0
    %10 = vsyncpa [#allocation6], 0
    %s11 = scalar_lea.sflag [#allocation6], 1
    %12 = vsyncpa %s11, 0
    %13 = vsyncpa [#allocation4], 0
    %s14 = scalar_lea.sflag [#allocation4], 1
    %15 = vsyncpa %s14, 0
    loop: start=0, step=1, limit=4
    $region2: #{tpu_custom_call.1} parent=1 // loop_pre_header
      _
    $region3: #{tpu_custom_call.1} parent=1 // loop_header
      %s17 = sphi 0, %s21
      %p18 = scmp.ge.s32.totalorder %s17, 4
      %s24 = sphi 0, %s36
      %s25 = sphi 0, %s32
      %s26 = sphi 0, %s24
      %s27 = sphi 0, %s25
      %s28 = sphi 0, %s26
      %s29 = sphi 0, %s27
      %s41 = sphi 0, %s43
      %s44 = sphi 0, %s41
      %s45 = sphi 0, %s44
      %s61 = sphi 0, %s45
      %s67 = sphi 0, %s69
      %s70 = sphi 0, %s67
      %s71 = sphi 0, %s70
      %s87 = sphi 0, %s71
      %s95 = sphi 0, %s97
      %s98 = sphi 0, %s95
      %s99 = sphi 0, %s98
      %s115 = sphi 0, %s99
    $region4: #{tpu_custom_call.1} parent=1 // loop_header_branch
      %20 = sbr.rel (%p18) target = $region8
    $region5: #{tpu_custom_call.1} parent=1 // loop_body
      %s22 = ssub.s32 %s17, 1
      %s23 = ssub.s32 %s17, 2
      %s30 = sadd.s32 1, %s25
      %p31 = scmp.ge.s32.totalorder %s30, 1
      %s32 = scalar_select %p31, 0, %s30
      %s33 = sadd.s32 1, %s24
      %s34 = scalar_select %p31, %s33, %s24
      %p35 = scmp.ge.s32.totalorder %s34, 2
      %s36 = scalar_select %p35, 0, %s34
      %s37 = ssub.s32 %s24, %s36
      %s38 = ssub.s32 %s25, %s32
      %s39 = sor.u32 %s37, %s38
      %p40 = scmp.eq.s32.totalorder %s39, 0
      %s42 = sadd.s32 %s41, 1
      %s43 = scalar_select %p40, %s41, %s42
      %p46 = pneg %p40
      %p47 = scmp.eq.s32.totalorder %s17, 1
      %p48 = por %p46, %p47
      %p49 = scmp.ne.s32.totalorder %s41, %s44
      %p50 = scmp.eq.s32.totalorder %s17, 0
      %p51 = por %p49, %p50
      %p52 = scmp.ne.s32.totalorder %s41, %s44
      %p53 = scmp.eq.s32.totalorder %s22, 1
      %p54 = por %p52, %p53
      %p55 = scmp.ne.s32.totalorder %s44, %s45
      %p56 = scmp.eq.s32.totalorder %s22, 0
      %p57 = por %p55, %p56
      %p58 = scmp.ne.s32.totalorder %s44, %s45
      %p59 = scmp.eq.s32.totalorder %s23, 1
      %p60 = por %p58, %p59
      %p62 = scmp.ne.s32.totalorder %s45, %s61
      %p63 = scmp.eq.s32.totalorder %s23, 0
      %p64 = por %p62, %p63
      %s65 = ssub.s32 %s24, %s36
      %p66 = scmp.eq.s32.totalorder %s65, 0
      %s68 = sadd.s32 %s67, 1
      %s69 = scalar_select %p66, %s67, %s68
      %p72 = pneg %p66
      %p73 = scmp.eq.s32.totalorder %s17, 1
      %p74 = por %p72, %p73
      %p75 = scmp.ne.s32.totalorder %s67, %s70
      %p76 = scmp.eq.s32.totalorder %s17, 0
      %p77 = por %p75, %p76
      %p78 = scmp.ne.s32.totalorder %s67, %s70
      %p79 = scmp.eq.s32.totalorder %s22, 1
      %p80 = por %p78, %p79
      %p81 = scmp.ne.s32.totalorder %s70, %s71
      %p82 = scmp.eq.s32.totalorder %s22, 0
      %p83 = por %p81, %p82
      %p84 = scmp.ne.s32.totalorder %s70, %s71
      %p85 = scmp.eq.s32.totalorder %s23, 1
      %p86 = por %p84, %p85
      %p88 = scmp.ne.s32.totalorder %s71, %s87
      %p89 = scmp.eq.s32.totalorder %s23, 0
      %p90 = por %p88, %p89
      %s91 = ssub.s32 %s24, %s36
      %s92 = ssub.s32 %s25, %s32
      %s93 = sor.u32 %s91, %s92
      %p94 = scmp.eq.s32.totalorder %s93, 0
      %s96 = sadd.s32 %s95, 1
      %s97 = scalar_select %p94, %s95, %s96
      %p100 = pneg %p94
      %p101 = scmp.eq.s32.totalorder %s17, 1
      %p102 = por %p100, %p101
      %p103 = scmp.ne.s32.totalorder %s95, %s98
      %p104 = scmp.eq.s32.totalorder %s17, 0
      %p105 = por %p103, %p104
      %p106 = scmp.ne.s32.totalorder %s95, %s98
      %p107 = scmp.eq.s32.totalorder %s22, 1
      %p108 = por %p106, %p107
      %p109 = scmp.ne.s32.totalorder %s98, %s99
      %p110 = scmp.eq.s32.totalorder %s22, 0
      %p111 = por %p109, %p110
      %p112 = scmp.ne.s32.totalorder %s98, %s99
      %p113 = scmp.eq.s32.totalorder %s23, 1
      %p114 = por %p112, %p113
      %p116 = scmp.ne.s32.totalorder %s99, %s115
      %p117 = scmp.eq.s32.totalorder %s23, 0
      %p118 = por %p116, %p117
      %p119 = scmp.le.s32.totalorder 1, %s17
      %p120 = scmp.lt.s32.totalorder %s17, 3
      %p121 = pnand %p119, %p120
      %p122 = pneg %p121
      // Predicated region
      $region9: #{tpu_custom_call.1} parent=5 // pred_check
        _
      $region10: #{tpu_custom_call.1} parent=5 // pred_check_branch
        %124 = sbr.rel (%p121) target = $region12
      $region11: #{tpu_custom_call.1} parent=5 // pred_region
        %s125 = ssub.s32 %s17, 1
      $region12: #{tpu_custom_call.1} parent=5 // pred_fallthru
        _
      %p126 = scmp.lt.s32.totalorder %s17, 2
      // Predicated region
      $region13: #{tpu_custom_call.1} parent=5 // pred_check
        %p127 = pneg %p126
      $region14: #{tpu_custom_call.1} parent=5 // pred_check_branch
        %129 = sbr.rel (%p127) target = $region16
      $region15: #{tpu_custom_call.1} parent=5 // pred_region
        // Predicated region
        $region17: #{tpu_custom_call.1} parent=15 // pred_check
          %p130 = pneg %p51
        $region18: #{tpu_custom_call.1} parent=15 // pred_check_branch
          %132 = sbr.rel (%p130) target = $region20
        $region19: #{tpu_custom_call.1} parent=15 // pred_region
          %s133 = sand.u32 %s41, 1
          %s134 = scalar_lea.sflag [#allocation3], %s133
          %s135 = sand.u32 %s41, 1
          %s136 = smul.addr %s135, 16
          %s137 = scalar_lea.vmem [#allocation2], %s136
          %s138 = smul.u32 2, %s25
          %s140 = ssub.s32 256, 256
          %141 = vsyncadd %s134, %s140
          %s142 = smul.addr %s24, 2
          %s143 = sadd.s32 %s138, %s142
          %s144 = smul.addr %s143, 128
          %s145 = scalar_lea.hbm %s0, %s144
          %s146 = sshll.u32 %s137, 4
          %s147 = int_to_ptr.vmem [resolvable:$true] %s146
          %152 = dma.hbm_to_vmem [thread:$0]  %s145, 256, %s147, %s134, 128, 128, 8
        $region20: #{tpu_custom_call.1} parent=15 // pred_fallthru
          _
        // Predicated region
        $region21: #{tpu_custom_call.1} parent=15 // pred_check
          %p153 = pneg %p77
        $region22: #{tpu_custom_call.1} parent=15 // pred_check_branch
          %155 = sbr.rel (%p153) target = $region24
        $region23: #{tpu_custom_call.1} parent=15 // pred_region
          %s156 = sand.u32 %s67, 1
          %s157 = scalar_lea.sflag [#allocation6], %s156
          %s158 = sand.u32 %s67, 1
          %s159 = smul.addr %s158, 2
          %s160 = scalar_lea.vmem [#allocation5], %s159
          %s162 = ssub.s32 32, 32
          %163 = vsyncadd %s157, %s162
          %s164 = smul.addr %s24, 32
          %s165 = scalar_lea.hbm %s1, %s164
          %s167 = sshll.u32 %s160, 4
          %s168 = int_to_ptr.vmem [resolvable:$true] %s167
          %170 = dma.hbm_to_vmem [thread:$0]  %s165, 32, %s168, %s157
        $region24: #{tpu_custom_call.1} parent=15 // pred_fallthru
          _
      $region16: #{tpu_custom_call.1} parent=5 // pred_fallthru
        _
      %p171 = scmp.le.s32.totalorder 1, %s17
      %p172 = scmp.lt.s32.totalorder %s17, 3
      %p173 = pnand %p171, %p172
      %p174 = pneg %p173
      // Predicated region
      $region25: #{tpu_custom_call.1} parent=5 // pred_check
        _
      $region26: #{tpu_custom_call.1} parent=5 // pred_check_branch
        %176 = sbr.rel (%p173) target = $region28
      $region27: #{tpu_custom_call.1} parent=5 // pred_region
        %s177 = ssub.s32 %s17, 1
        %s178 = sand.u32 %s44, 1
        %s179 = scalar_lea.sflag [#allocation3], %s178
        %s180 = sand.u32 %s44, 1
        %s181 = smul.addr %s180, 16
        %s182 = scalar_lea.vmem [#allocation2], %s181
        // Predicated region
        $region29: #{tpu_custom_call.1} parent=27 // pred_check
          %p183 = pneg %p57
        $region30: #{tpu_custom_call.1} parent=27 // pred_check_branch
          %185 = sbr.rel (%p183) target = $region32
        $region31: #{tpu_custom_call.1} parent=27 // pred_region
          %186 = dma.done %s179, 256
        $region32: #{tpu_custom_call.1} parent=27 // pred_fallthru
          _
        %s187 = sand.u32 %s70, 1
        %s188 = scalar_lea.sflag [#allocation6], %s187
        %s189 = sand.u32 %s70, 1
        %s190 = smul.addr %s189, 2
        %s191 = scalar_lea.vmem [#allocation5], %s190
        // Predicated region
        $region33: #{tpu_custom_call.1} parent=27 // pred_check
          %p192 = pneg %p83
        $region34: #{tpu_custom_call.1} parent=27 // pred_check_branch
          %194 = sbr.rel (%p192) target = $region36
        $region35: #{tpu_custom_call.1} parent=27 // pred_region
          %195 = dma.done %s188, 32
        $region36: #{tpu_custom_call.1} parent=27 // pred_fallthru
          _
        %s196 = sand.u32 %s44, 1
        %s197 = scalar_lea.sflag [#allocation3], %s196
        %s198 = sand.u32 %s44, 1
        %s199 = smul.addr %s198, 16
        %s200 = scalar_lea.vmem [#allocation2], %s199
        %p201 = pneg %p57
        %p202 = pneg %p54
        %s203 = sand.u32 %s70, 1
        %s204 = scalar_lea.sflag [#allocation6], %s203
        %s205 = sand.u32 %s70, 1
        %s206 = smul.addr %s205, 2
        %s207 = scalar_lea.vmem [#allocation5], %s206
        %p208 = pneg %p83
        %p209 = pneg %p80
        %p210 = pneg %p111
        %p211 = pneg %p108
        %s212 = sand.u32 %s98, 1
        %s213 = scalar_lea.sflag [#allocation4], %s212
        %s214 = sand.u32 %s98, 1
        %s215 = smul.addr %s214, 16
        %s216 = scalar_lea.vmem [#allocation7], %s215
        %s217 = smul.u32 2, %s27
        %s218 = smul.u32 2, %s27
        %v219 = vld [vmem:[%s182] sm:$0xff]
        %v220 = vld [vmem:[%s182 + $0x8] sm:$0xff]
        %v221 = vld [vmem:[%s191] sm:$0x1]
        %v222 = vld [vmem:[%s191 + $0x1] sm:$0x1]
        %223 = vadd.xlane.f32.xlu0 %v219
        %v224 = vpop.xlane.xlu0 %223
        %225 = vadd.xlane.f32.xlu0 %v220
        %v226 = vpop.xlane.xlu0 %225
        %v227 = vmul.f32 %v224, 0.0078125
        %v228 = vmul.f32 %v226, 0.0078125
        %v229 = vsub.f32 %v219, %v227
        %v230 = vsub.f32 %v220, %v228
        %v231 = vmul.f32 %v229, %v229
        %v232 = vmul.f32 %v230, %v230
        %233 = vadd.xlane.f32.xlu0 %v231
        %v234 = vpop.xlane.xlu0 %233
        %235 = vadd.xlane.f32.xlu0 %v232
        %v236 = vpop.xlane.xlu0 %235
        %v237 = vmul.f32 %v234, 0.0078125
        %v238 = vmul.f32 %v236, 0.0078125
        %v239 = vadd.f32 %v237, 1e-06
        %v240 = vadd.f32 %v238, 1e-06
        %v241 = vrsqrt.pop %v239
        %v242 = vrsqrt.pop %v240
        %v243 = vmul.f32 %v229, %v241
        %v244 = vmul.f32 %v230, %v242
        %v245 = vlaneseq
        %v246 = vshrl.u32 %v245, 7
        %v247 = vsub.s32 0, %v246
        %v248 = vrot.slane %v221, %v247
        %v249 = vmul.f32 %v243, %v248
        %v250 = vmul.f32 %v244, %v248
        %v251 = vlaneseq
        %v252 = vshrl.u32 %v251, 7
        %v253 = vsub.s32 0, %v252
        %v254 = vrot.slane %v222, %v253
        %v255 = vadd.f32 %v249, %v254
        %v256 = vadd.f32 %v250, %v254
        %257 = vst [vmem:[%s216] sm:$0xff] %v255
        %258 = vst [vmem:[%s216 + $0x8] sm:$0xff] %v256
        %s259 = sand.u32 %s98, 1
        %s260 = scalar_lea.sflag [#allocation4], %s259
        %s261 = sand.u32 %s98, 1
        %s262 = smul.addr %s261, 16
        %s263 = scalar_lea.vmem [#allocation7], %s262
        // Predicated region
        $region37: #{tpu_custom_call.1} parent=27 // pred_check
          %p264 = pneg %p108
        $region38: #{tpu_custom_call.1} parent=27 // pred_check_branch
          %266 = sbr.rel (%p264) target = $region40
        $region39: #{tpu_custom_call.1} parent=27 // pred_region
          %s267 = smul.u32 2, %s27
          %s269 = ssub.s32 256, 256
          %270 = vsyncadd %s260, %s269
          %s271 = smul.addr %s26, 2
          %s272 = sadd.s32 %s267, %s271
          %s273 = smul.addr %s272, 128
          %s274 = scalar_lea.hbm %s2, %s273
          %s275 = sshll.u32 %s263, 4
          %s276 = int_to_ptr.vmem [resolvable:$true] %s275
          %281 = dma.vmem_to_hbm [thread:$0]  %s276, 256, %s274, %s260, 128, 128, 8
        $region40: #{tpu_custom_call.1} parent=27 // pred_fallthru
          _
      $region28: #{tpu_custom_call.1} parent=5 // pred_fallthru
        _
      %p282 = scmp.le.s32.totalorder 2, %s17
      // Predicated region
      $region41: #{tpu_custom_call.1} parent=5 // pred_check
        %p283 = pneg %p282
      $region42: #{tpu_custom_call.1} parent=5 // pred_check_branch
        %285 = sbr.rel (%p283) target = $region44
      $region43: #{tpu_custom_call.1} parent=5 // pred_region
        %s286 = ssub.s32 %s17, 2
        // Predicated region
        $region45: #{tpu_custom_call.1} parent=43 // pred_check
          %p287 = pneg %p114
        $region46: #{tpu_custom_call.1} parent=43 // pred_check_branch
          %289 = sbr.rel (%p287) target = $region48
        $region47: #{tpu_custom_call.1} parent=43 // pred_region
          %s290 = sand.u32 %s99, 1
          %s291 = scalar_lea.sflag [#allocation4], %s290
          %s292 = sand.u32 %s99, 1
          %s293 = smul.addr %s292, 16
          %s294 = scalar_lea.vmem [#allocation7], %s293
          %295 = dma.done %s291, 256
        $region48: #{tpu_custom_call.1} parent=43 // pred_fallthru
          _
      $region44: #{tpu_custom_call.1} parent=5 // pred_fallthru
        _
    $region6: #{tpu_custom_call.1} parent=1 // loop_footer
      %s21 = sadd.s32 1, %s17
    $region7: #{tpu_custom_call.1} parent=1 // loop_footer_branch
      %16 = sbr.rel target = $region3
    $region8: #{tpu_custom_call.1} parent=1 // loop_exit
      _
    %296 = vsyncpa [#allocation3], 1
    %s297 = scalar_lea.sflag [#allocation3], 1
    %298 = vsyncpa %s297, 1
    %299 = vsyncpa [#allocation6], 1
    %s300 = scalar_lea.sflag [#allocation6], 1
    %301 = vsyncpa %s300, 1
    %302 = vsyncpa [#allocation4], 1
    %s303 = scalar_lea.sflag [#allocation4], 1
    %304 = vsyncpa %s303, 1

</llo_original>
